<compile_context>
chip_gen: v7x
topology: tpu7x:2x2x1
jax: 0.10.0
libtpu: 0.0.40
codegen_flags: <defaults>
</compile_context>

<pallas_src>
import jax
import jax.numpy as jnp
import numpy as np
from jax.experimental import pallas as pl
from jax.experimental.pallas import tpu as pltpu


def _round_up(x, m):
    return ((x + m - 1) // m) * m


def patch_camelyon_forward(img_nchw, params, *, tile_s=1024):
    """img_nchw: [N, C, H, W] float -> logits [N] (n_class == 1, both squeezes)."""
    conv_w, conv_b = params["conv_w"], params["conv_b"]   # [3,3,C,F], [1,F]
    fc_w, fc_b = params["fc_w"], params["fc_b"]           # [F,n_class], [1,n_class]
    N, C, H, W = img_nchw.shape
    F = conv_w.shape[-1]
    n_class = fc_w.shape[-1]

    HW = H * W
    K = 9 * C
    K1 = K + 1                                  # +1 bias column (un-padded in HBM)
    F_PAD = _round_up(max(F, 128), 128)
    OUT_PAD = _round_up(max(n_class, 128), 128)

    # Spatial tiling: tile_s multiple of 8, capped at padded HW; pad HW up to a
    # tile_s multiple in the wrapper (zero rows contribute nothing, see below).
    tile_s = max(8, (int(tile_s) // 8) * 8)
    tile_s = min(tile_s, _round_up(HW, 8))
    HW_PAD = _round_up(HW, tile_s)
    n_spatial = HW_PAD // tile_s
    inv_hw = 1.0 / float(HW)                    # mean over *real* pixels only

    # ---- glue: NCHW -> NHWC, 'SAME' zero-pad, per-sample im2col [N, HW, 9C] ----
    x = jnp.transpose(img_nchw, (0, 2, 3, 1)).astype(jnp.float32)
    xp = jnp.pad(x, ((0, 0), (1, 1), (1, 1), (0, 0)))
    taps = [xp[:, kh:kh + H, kw:kw + W, :] for kh in range(3) for kw in range(3)]
    cols = jnp.stack(taps, axis=3).reshape(N, HW, K)
    ones = jnp.ones((N, HW, 1), jnp.float32)            # bias column (1.0 on real rows)
    cols = jnp.concatenate([cols, ones], axis=2)        # [N, HW, K+1]
    # pad spatial rows with zeros (bias column too -> relu(0)=0, no pooled effect)
    cols = jnp.pad(cols, ((0, 0), (0, HW_PAD - HW), (0, 0))).astype(jnp.bfloat16)

    # weights: conv (with folded bias row) in bf16, head in f32, lane-padded.
    wc = jnp.concatenate([conv_w.reshape(K, F),
                          conv_b.reshape(1, F)], axis=0)              # [K+1, F]
    wc = jnp.pad(wc, ((0, 0), (0, F_PAD - F))).astype(jnp.bfloat16)
    wl = jnp.pad(fc_w.astype(jnp.float32), ((0, F_PAD - F), (0, OUT_PAD - n_class)))
    bl = jnp.pad(fc_b.reshape(1, n_class).astype(jnp.float32),
                 ((0, 0), (0, OUT_PAD - n_class)))

    def kernel(cols_ref, wc_ref, wl_ref, bl_ref, out_ref, acc_ref):
        s = pl.program_id(1)

        @pl.when(s == 0)
        def _():
            acc_ref[...] = jnp.zeros_like(acc_ref)

        # synthetic backbone: 3x3 conv (+bias, folded) as im2col matmul + ReLU.
        feat = jnp.dot(cols_ref[...], wc_ref[...],
                       preferred_element_type=jnp.float32)        # [tile_s, F_PAD]
        feat = jnp.maximum(feat, 0.0)
        # adaptive_avg_pool2d((1,1)): sublane-aligned running partial sums
        # (VPU adds over the untiled leading axis, no per-step XLU reduce).
        acc_ref[...] += jnp.sum(feat.reshape(tile_s // 8, 8, F_PAD), axis=0)

        @pl.when(s == pl.num_programs(1) - 1)
        def _():
            # collapse the 8 partial-sum rows once, finish the mean.
            pooled = jnp.sum(acc_ref[...], axis=0, keepdims=True) * inv_hw  # [1, F_PAD]
            # nn.Dropout is identity at inference; output_layer: Linear(F, n_class)
            logits = jnp.dot(pooled, wl_ref[...],
                             preferred_element_type=jnp.float32) + bl_ref[...]
            out_ref[...] = logits                                   # [1, OUT_PAD]

    out = pl.pallas_call(
        kernel,
        out_shape=jax.ShapeDtypeStruct((N, 1, OUT_PAD), jnp.float32),
        grid_spec=pltpu.PrefetchScalarGridSpec(
            num_scalar_prefetch=0,
            grid=(N, n_spatial),
            in_specs=[
                # streamed: un-padded last dim (full-extent block, K1 < 128 is legal)
                pl.BlockSpec((None, tile_s, K1), lambda b, s: (b, s, 0)),
                pl.BlockSpec((K1, F_PAD), lambda b, s: (0, 0)),      # resident
                pl.BlockSpec((F_PAD, OUT_PAD), lambda b, s: (0, 0)), # resident
                pl.BlockSpec((1, OUT_PAD), lambda b, s: (0, 0)),     # resident
            ],
            out_specs=pl.BlockSpec((None, 1, OUT_PAD), lambda b, s: (b, 0, 0)),
            scratch_shapes=[pltpu.VMEM((8, F_PAD), jnp.float32)],
        ),
        compiler_params=pltpu.CompilerParams(
            dimension_semantics=("parallel", "arbitrary"),
            vmem_limit_bytes=32 * 1024 * 1024,
        ),
    )(cols, wc, wl, bl)

    logits = out.reshape(N, OUT_PAD)[:, :n_class]
    # DensenetCustom.forward squeeze + PatchCamelyonModel.forward squeeze -> [N]
    # (note: like torch .squeeze(), a batch of 1 would collapse to a scalar)
    return jnp.squeeze(logits)


def init_params(key, in_ch, feat_size, n_class):
    k1, k2, k3, k4 = jax.random.split(key, 4)
    return dict(
        conv_w=jax.random.normal(k1, (3, 3, in_ch, feat_size), jnp.float32) * 0.1,
        conv_b=jax.random.normal(k2, (1, feat_size), jnp.float32) * 0.1,
        fc_w=jax.random.normal(k3, (feat_size, n_class), jnp.float32) * 0.1,
        fc_b=jax.random.normal(k4, (1, n_class), jnp.float32) * 0.1,
    )


def reference_forward(img_nchw, params):
    """Pure-JAX (f32) reference of the same forward for correctness checking."""
    x = jnp.transpose(img_nchw, (0, 2, 3, 1)).astype(jnp.float32)
    feat = jax.lax.conv_general_dilated(
        x, params["conv_w"], window_strides=(1, 1), padding="SAME",
        dimension_numbers=("NHWC", "HWIO", "NHWC"))
    feat = jnp.maximum(feat + params["conv_b"].reshape(1, 1, 1, -1), 0.0)
    pooled = feat.mean(axis=(1, 2))
    logits = pooled @ params["fc_w"] + params["fc_b"]
    return jnp.squeeze(logits)


if __name__ == "__main__":
    N, C, H, W = 2, 4, 16, 16          # small NCHW image batch
    FEAT, N_CLASS = 32, 1              # feat_size of stand-in backbone, n_class=1

    key = jax.random.PRNGKey(0)
    k_img, k_par = jax.random.split(key)
    img = jax.random.normal(k_img, (N, C, H, W), jnp.float32)
    params = init_params(k_par, C, FEAT, N_CLASS)

    out = patch_camelyon_forward(img, params)
    out = jax.block_until_ready(out)

    ref = jax.block_until_ready(reference_forward(img, params))
    assert out.shape == (N,), out.shape
    # bf16 conv path -> looser tolerance than the f32 reference
    np.testing.assert_allclose(np.asarray(out), np.asarray(ref), rtol=2e-2, atol=2e-2)

    print("KERNEL_OK")
</pallas_src>

<mosaic_0001>
module attributes {stable_mosaic.version = 11 : i64} {
  func.func @kernel(%arg0: i32, %arg1: i32, %arg2: memref<1x256x37xbf16, #tpu.memory_space<vmem>>, %arg3: memref<37x128xbf16, #tpu.memory_space<vmem>>, %arg4: memref<128x128xf32, #tpu.memory_space<vmem>>, %arg5: memref<1x128xf32, #tpu.memory_space<vmem>>, %arg6: memref<1x1x128xf32, #tpu.memory_space<vmem>>, %arg7: memref<8x128xf32, #tpu.memory_space<vmem>>) attributes {dimension_semantics = [#tpu.dimension_semantics<parallel>, #tpu.dimension_semantics<arbitrary>], iteration_bounds = array<i64: 2, 1>, scalar_prefetch = 0 : i64, scratch_operands = 1 : i64, tpu.core_type = #tpu.core_type<tc>, window_params = [{transform_indices = @transform_0, window_bounds = array<i64: 1, 256, 37>}, {pipeline_mode = #tpu.pipeline_mode<synchronous>, transform_indices = @transform_1, window_bounds = array<i64: 37, 128>}, {pipeline_mode = #tpu.pipeline_mode<synchronous>, transform_indices = @transform_2, window_bounds = array<i64: 128, 128>}, {pipeline_mode = #tpu.pipeline_mode<synchronous>, transform_indices = @transform_3, window_bounds = array<i64: 1, 128>}, {transform_indices = @transform_4, window_bounds = array<i64: 1, 1, 128>}]} {
    %c0_i32 = arith.constant 0 : i32
    %0 = arith.cmpi eq, %arg1, %c0_i32 : i32
    %1 = arith.extui %0 : i1 to i32
    %c0_i32_0 = arith.constant 0 : i32
    %2 = arith.cmpi ne, %1, %c0_i32_0 : i32
    scf.if %2 {
      %cst_13 = arith.constant 0.000000e+00 : f32
      %17 = vector.broadcast %cst_13 : f32 to vector<8x128xf32>
      %c0_14 = arith.constant 0 : index
      %c0_15 = arith.constant 0 : index
      %18 = vector.load %arg7[%c0_14, %c0_15] : memref<8x128xf32, #tpu.memory_space<vmem>>, vector<8x128xf32>
      tpu.vector_store %arg7[%c0_14, %c0_15], %17 {strides = array<i32>} : memref<8x128xf32, #tpu.memory_space<vmem>>, vector<8x128xf32>,
    } else {
    }
    %c0 = arith.constant 0 : index
    %c0_1 = arith.constant 0 : index
    %c0_2 = arith.constant 0 : index
    %3 = vector.load %arg2[%c0, %c0_1, %c0_2] : memref<1x256x37xbf16, #tpu.memory_space<vmem>>, vector<1x256x37xbf16>
    %4 = vector.shape_cast %3 : vector<1x256x37xbf16> to vector<256x37xbf16>
    %c0_3 = arith.constant 0 : index
    %c0_4 = arith.constant 0 : index
    %5 = vector.load %arg3[%c0_3, %c0_4] : memref<37x128xbf16, #tpu.memory_space<vmem>>, vector<37x128xbf16>
    %cst = arith.constant dense<0.000000e+00> : vector<256x128xf32>
    %6 = tpu.matmul %4, %5, %cst {dimension_numbers = #tpu.dot_dimension_numbers<[1], [0], [0], [1], [0, 0, 1, 1], [], []>} : vector<256x37xbf16>, vector<37x128xbf16>, vector<256x128xf32> -> vector<256x128xf32>
    %cst_5 = arith.constant 0.000000e+00 : f32
    %7 = vector.broadcast %cst_5 : f32 to vector<256x128xf32>
    %8 = arith.maximumf %6, %7 : vector<256x128xf32>
    %c0_6 = arith.constant 0 : index
    %c0_7 = arith.constant 0 : index
    %9 = vector.load %arg7[%c0_6, %c0_7] : memref<8x128xf32, #tpu.memory_space<vmem>>, vector<8x128xf32>
    %10 = vector.shape_cast %8 : vector<256x128xf32> to vector<32x8x128xf32>
    %cst_8 = arith.constant dense<0.000000e+00> : vector<8x128xf32>
    %11 = vector.multi_reduction <add>, %10, %cst_8 [0] : vector<32x8x128xf32> to vector<8x128xf32>
    %12 = arith.addf %9, %11 : vector<8x128xf32>
    %c0_9 = arith.constant 0 : index
    %c0_10 = arith.constant 0 : index
    %13 = vector.load %arg7[%c0_9, %c0_10] : memref<8x128xf32, #tpu.memory_space<vmem>>, vector<8x128xf32>
    tpu.vector_store %arg7[%c0_9, %c0_10], %12 {strides = array<i32>} : memref<8x128xf32, #tpu.memory_space<vmem>>, vector<8x128xf32>,
    %c0_i32_11 = arith.constant 0 : i32
    %14 = arith.cmpi eq, %arg1, %c0_i32_11 : i32
    %15 = arith.extui %14 : i1 to i32
    %c0_i32_12 = arith.constant 0 : i32
    %16 = arith.cmpi ne, %15, %c0_i32_12 : i32
    scf.if %16 {
      %c0_13 = arith.constant 0 : index
      %c0_14 = arith.constant 0 : index
      %17 = vector.load %arg7[%c0_13, %c0_14] : memref<8x128xf32, #tpu.memory_space<vmem>>, vector<8x128xf32>
      %cst_15 = arith.constant dense<0.000000e+00> : vector<128xf32>
      %18 = vector.multi_reduction <add>, %17, %cst_15 [0] : vector<8x128xf32> to vector<128xf32>
      %19 = vector.shape_cast %18 : vector<128xf32> to vector<1x128xf32>
      %cst_16 = arith.constant 3.906250e-03 : f32
      %20 = vector.broadcast %cst_16 : f32 to vector<1x128xf32>
      %21 = arith.mulf %19, %20 : vector<1x128xf32>
      %c0_17 = arith.constant 0 : index
      %c0_18 = arith.constant 0 : index
      %22 = vector.load %arg4[%c0_17, %c0_18] : memref<128x128xf32, #tpu.memory_space<vmem>>, vector<128x128xf32>
      %cst_19 = arith.constant dense<0.000000e+00> : vector<1x128xf32>
      %23 = tpu.matmul %21, %22, %cst_19 {dimension_numbers = #tpu.dot_dimension_numbers<[1], [0], [0], [1], [0, 0, 1, 1], [], []>} : vector<1x128xf32>, vector<128x128xf32>, vector<1x128xf32> -> vector<1x128xf32>
      %c0_20 = arith.constant 0 : index
      %c0_21 = arith.constant 0 : index
      %24 = vector.load %arg5[%c0_20, %c0_21] : memref<1x128xf32, #tpu.memory_space<vmem>>, vector<1x128xf32>
      %25 = arith.addf %23, %24 : vector<1x128xf32>
      %c0_22 = arith.constant 0 : index
      %c0_23 = arith.constant 0 : index
      %c0_24 = arith.constant 0 : index
      %26 = vector.load %arg6[%c0_22, %c0_23, %c0_24] : memref<1x1x128xf32, #tpu.memory_space<vmem>>, vector<1x1x128xf32>
      %27 = vector.shape_cast %26 : vector<1x1x128xf32> to vector<1x128xf32>
      %28 = vector.shape_cast %25 : vector<1x128xf32> to vector<1x1x128xf32>
      tpu.vector_store %arg6[%c0_22, %c0_23, %c0_24], %28 {strides = array<i32>} : memref<1x1x128xf32, #tpu.memory_space<vmem>>, vector<1x1x128xf32>,
    } else {
    }
    return
  }
  func.func @transform_0(%arg0: i32, %arg1: i32) -> (i32, i32, i32) {
    %c0_i32 = arith.constant 0 : i32
    %c0_i32_0 = arith.constant 0 : i32
    return %arg0, %arg1, %c0_i32 : i32, i32, i32
  }
  func.func @transform_1(%arg0: i32, %arg1: i32) -> (i32, i32) {
    %c0_i32 = arith.constant 0 : i32
    %c0_i32_0 = arith.constant 0 : i32
    %c0_i32_1 = arith.constant 0 : i32
    return %c0_i32, %c0_i32_0 : i32, i32
  }
  func.func @transform_2(%arg0: i32, %arg1: i32) -> (i32, i32) {
    %c0_i32 = arith.constant 0 : i32
    %c0_i32_0 = arith.constant 0 : i32
    %c0_i32_1 = arith.constant 0 : i32
    return %c0_i32, %c0_i32_0 : i32, i32
  }
  func.func @transform_3(%arg0: i32, %arg1: i32) -> (i32, i32) {
    %c0_i32 = arith.constant 0 : i32
    %c0_i32_0 = arith.constant 0 : i32
    %c0_i32_1 = arith.constant 0 : i32
    return %c0_i32, %c0_i32_0 : i32, i32
  }
  func.func @transform_4(%arg0: i32, %arg1: i32) -> (i32, i32, i32) {
    %c0_i32 = arith.constant 0 : i32
    %c0_i32_0 = arith.constant 0 : i32
    %c0_i32_1 = arith.constant 0 : i32
    return %arg0, %c0_i32, %c0_i32_0 : i32, i32, i32
  }
}

</mosaic_0001>

<llo_original>
// kernel: tpu_custom_call.1
$region0: #{tpu_custom_call.1}
  #allocation0 [shape = 'u32[]', space=smem, size = 0x4, offset = 0x4, fixed_abs, tag = 'smem constant byte address 0x4 - core index']
  #allocation1 [shape = 'u32[144,128]{1,0:T(1,128)}', space=vmem, size = 0x12000, scoped, tag = 'internal scratch']
  #allocation2 [shape = 'f32[8,128]{1,0:T(8,128)}', space=vmem, size = 0x1000, scoped, tag = 'scratch operand']
  %s0 = inlined_call_operand.vmem [shape: bf16[2,256,37], index: 0, kind: input, shape index: {}]
  %s1 = inlined_call_operand.vmem [shape: bf16[37,128], index: 1, kind: input, shape index: {}]
  %s2 = inlined_call_operand.vmem [shape: f32[128,128], index: 2, kind: input, shape index: {}]
  %s3 = inlined_call_operand.vmem [shape: f32[1,128], index: 3, kind: input, shape index: {}]
  %s4 = inlined_call_operand.hbm [shape: f32[2,1,128], index: 4, kind: output, shape index: {}]
  %s5 = sld [smem:[#allocation0]]
  $region57: #{tpu_custom_call.1} parent=0
    _
  %s7 = ssub.s32 1, %s5
  %s8 = scalar_select 0, %s7, %s5
  $region1: #{tpu_custom_call.1} parent=0
    #allocation3 [shape = 'u8[1024]{0}', space=vmem, size = 0x400, scoped, tag = 'output window, operand 0']
    #allocation4 [shape = 's32[2]{0}', space=sflag, size = 0x8, scoped, tag = 'scoped memory for tpu_custom_call.1']
    %9 = vsyncpa [#allocation4], 0
    %s10 = scalar_lea.sflag [#allocation4], 1
    %11 = vsyncpa %s10, 0
    loop: start=0, step=1, limit=4
    $region2: #{tpu_custom_call.1} parent=1 // loop_pre_header
      _
    $region3: #{tpu_custom_call.1} parent=1 // loop_header
      %s13 = sphi 0, %s17
      %p14 = scmp.ge.s32.totalorder %s13, 4
      %s20 = sphi 0, %s32
      %s21 = sphi 0, %s28
      %s22 = sphi 0, %s20
      %s23 = sphi 0, %s21
      %s24 = sphi 0, %s22
      %s25 = sphi 0, %s23
      %s37 = sphi 0, %s39
      %s40 = sphi 0, %s37
      %s41 = sphi 0, %s40
      %s57 = sphi 0, %s41
      %s61 = sphi 0, %s61
      %s63 = sphi 0, %s61
      %s64 = sphi 0, %s63
      %s78 = sphi 0, %s64
      %s82 = sphi 0, %s82
      %s84 = sphi 0, %s82
      %s85 = sphi 0, %s84
      %s99 = sphi 0, %s85
      %s103 = sphi 0, %s103
      %s105 = sphi 0, %s103
      %s106 = sphi 0, %s105
      %s120 = sphi 0, %s106
      %s126 = sphi 0, %s128
      %s129 = sphi 0, %s126
      %s130 = sphi 0, %s129
      %s146 = sphi 0, %s130
    $region4: #{tpu_custom_call.1} parent=1 // loop_header_branch
      %16 = sbr.rel (%p14) target = $region8
    $region5: #{tpu_custom_call.1} parent=1 // loop_body
      %s18 = ssub.s32 %s13, 1
      %s19 = ssub.s32 %s13, 2
      %s26 = sadd.s32 1, %s21
      %p27 = scmp.ge.s32.totalorder %s26, 1
      %s28 = scalar_select %p27, 0, %s26
      %s29 = sadd.s32 1, %s20
      %s30 = scalar_select %p27, %s29, %s20
      %p31 = scmp.ge.s32.totalorder %s30, 2
      %s32 = scalar_select %p31, 0, %s30
      %s33 = ssub.s32 %s20, %s32
      %s34 = ssub.s32 %s21, %s28
      %s35 = sor.u32 %s33, %s34
      %p36 = scmp.eq.s32.totalorder %s35, 0
      %s38 = sadd.s32 %s37, 1
      %s39 = scalar_select %p36, %s37, %s38
      %p42 = pneg %p36
      %p43 = scmp.eq.s32.totalorder %s13, 1
      %p44 = por %p42, %p43
      %p45 = scmp.ne.s32.totalorder %s37, %s40
      %p46 = scmp.eq.s32.totalorder %s13, 0
      %p47 = por %p45, %p46
      %p48 = scmp.ne.s32.totalorder %s37, %s40
      %p49 = scmp.eq.s32.totalorder %s18, 1
      %p50 = por %p48, %p49
      %p51 = scmp.ne.s32.totalorder %s40, %s41
      %p52 = scmp.eq.s32.totalorder %s18, 0
      %p53 = por %p51, %p52
      %p54 = scmp.ne.s32.totalorder %s40, %s41
      %p55 = scmp.eq.s32.totalorder %s19, 1
      %p56 = por %p54, %p55
      %p58 = scmp.ne.s32.totalorder %s41, %s57
      %p59 = scmp.eq.s32.totalorder %s19, 0
      %p60 = por %p58, %p59
      %s62 = sadd.s32 %s61, 1
      %p65 = scmp.eq.s32.totalorder %s13, 1
      %p66 = scmp.ne.s32.totalorder %s61, %s63
      %p67 = scmp.eq.s32.totalorder %s13, 0
      %p68 = por %p66, %p67
      %p69 = scmp.ne.s32.totalorder %s61, %s63
      %p70 = scmp.eq.s32.totalorder %s18, 1
      %p71 = por %p69, %p70
      %p72 = scmp.ne.s32.totalorder %s63, %s64
      %p73 = scmp.eq.s32.totalorder %s18, 0
      %p74 = por %p72, %p73
      %p75 = scmp.ne.s32.totalorder %s63, %s64
      %p76 = scmp.eq.s32.totalorder %s19, 1
      %p77 = por %p75, %p76
      %p79 = scmp.ne.s32.totalorder %s64, %s78
      %p80 = scmp.eq.s32.totalorder %s19, 0
      %p81 = por %p79, %p80
      %s83 = sadd.s32 %s82, 1
      %p86 = scmp.eq.s32.totalorder %s13, 1
      %p87 = scmp.ne.s32.totalorder %s82, %s84
      %p88 = scmp.eq.s32.totalorder %s13, 0
      %p89 = por %p87, %p88
      %p90 = scmp.ne.s32.totalorder %s82, %s84
      %p91 = scmp.eq.s32.totalorder %s18, 1
      %p92 = por %p90, %p91
      %p93 = scmp.ne.s32.totalorder %s84, %s85
      %p94 = scmp.eq.s32.totalorder %s18, 0
      %p95 = por %p93, %p94
      %p96 = scmp.ne.s32.totalorder %s84, %s85
      %p97 = scmp.eq.s32.totalorder %s19, 1
      %p98 = por %p96, %p97
      %p100 = scmp.ne.s32.totalorder %s85, %s99
      %p101 = scmp.eq.s32.totalorder %s19, 0
      %p102 = por %p100, %p101
      %s104 = sadd.s32 %s103, 1
      %p107 = scmp.eq.s32.totalorder %s13, 1
      %p108 = scmp.ne.s32.totalorder %s103, %s105
      %p109 = scmp.eq.s32.totalorder %s13, 0
      %p110 = por %p108, %p109
      %p111 = scmp.ne.s32.totalorder %s103, %s105
      %p112 = scmp.eq.s32.totalorder %s18, 1
      %p113 = por %p111, %p112
      %p114 = scmp.ne.s32.totalorder %s105, %s106
      %p115 = scmp.eq.s32.totalorder %s18, 0
      %p116 = por %p114, %p115
      %p117 = scmp.ne.s32.totalorder %s105, %s106
      %p118 = scmp.eq.s32.totalorder %s19, 1
      %p119 = por %p117, %p118
      %p121 = scmp.ne.s32.totalorder %s106, %s120
      %p122 = scmp.eq.s32.totalorder %s19, 0
      %p123 = por %p121, %p122
      %s124 = ssub.s32 %s20, %s32
      %p125 = scmp.eq.s32.totalorder %s124, 0
      %s127 = sadd.s32 %s126, 1
      %s128 = scalar_select %p125, %s126, %s127
      %p131 = pneg %p125
      %p132 = scmp.eq.s32.totalorder %s13, 1
      %p133 = por %p131, %p132
      %p134 = scmp.ne.s32.totalorder %s126, %s129
      %p135 = scmp.eq.s32.totalorder %s13, 0
      %p136 = por %p134, %p135
      %p137 = scmp.ne.s32.totalorder %s126, %s129
      %p138 = scmp.eq.s32.totalorder %s18, 1
      %p139 = por %p137, %p138
      %p140 = scmp.ne.s32.totalorder %s129, %s130
      %p141 = scmp.eq.s32.totalorder %s18, 0
      %p142 = por %p140, %p141
      %p143 = scmp.ne.s32.totalorder %s129, %s130
      %p144 = scmp.eq.s32.totalorder %s19, 1
      %p145 = por %p143, %p144
      %p147 = scmp.ne.s32.totalorder %s130, %s146
      %p148 = scmp.eq.s32.totalorder %s19, 0
      %p149 = por %p147, %p148
      %p150 = scmp.le.s32.totalorder 1, %s13
      %p151 = scmp.lt.s32.totalorder %s13, 3
      %p152 = pnand %p150, %p151
      %p153 = pneg %p152
      // Predicated region
      $region9: #{tpu_custom_call.1} parent=5 // pred_check
        _
      $region10: #{tpu_custom_call.1} parent=5 // pred_check_branch
        %155 = sbr.rel (%p152) target = $region12
      $region11: #{tpu_custom_call.1} parent=5 // pred_region
        %s156 = ssub.s32 %s13, 1
        // Predicated region
        $region13: #{tpu_custom_call.1} parent=11 // pred_check
          %p157 = pneg %p74
        $region14: #{tpu_custom_call.1} parent=11 // pred_check_branch
          %159 = sbr.rel (%p157) target = $region16
        $region15: #{tpu_custom_call.1} parent=11 // pred_region
          _
        $region16: #{tpu_custom_call.1} parent=11 // pred_fallthru
          _
        // Predicated region
        $region17: #{tpu_custom_call.1} parent=11 // pred_check
          %p160 = pneg %p95
        $region18: #{tpu_custom_call.1} parent=11 // pred_check_branch
          %162 = sbr.rel (%p160) target = $region20
        $region19: #{tpu_custom_call.1} parent=11 // pred_region
          _
        $region20: #{tpu_custom_call.1} parent=11 // pred_fallthru
          _
        // Predicated region
        $region21: #{tpu_custom_call.1} parent=11 // pred_check
          %p163 = pneg %p116
        $region22: #{tpu_custom_call.1} parent=11 // pred_check_branch
          %165 = sbr.rel (%p163) target = $region24
        $region23: #{tpu_custom_call.1} parent=11 // pred_region
          _
        $region24: #{tpu_custom_call.1} parent=11 // pred_fallthru
          _
      $region12: #{tpu_custom_call.1} parent=5 // pred_fallthru
        _
      %p166 = scmp.lt.s32.totalorder %s13, 2
      // Predicated region
      $region25: #{tpu_custom_call.1} parent=5 // pred_check
        %p167 = pneg %p166
      $region26: #{tpu_custom_call.1} parent=5 // pred_check_branch
        %169 = sbr.rel (%p167) target = $region28
      $region27: #{tpu_custom_call.1} parent=5 // pred_region
        // Predicated region
        $region29: #{tpu_custom_call.1} parent=27 // pred_check
          %p170 = pneg %p47
        $region30: #{tpu_custom_call.1} parent=27 // pred_check_branch
          %172 = sbr.rel (%p170) target = $region32
        $region31: #{tpu_custom_call.1} parent=27 // pred_region
          %s173 = smul.u32 32, %s21
          %p174 = scmp.lt.s32.totalorder %s20, 1
          %s175 = scalar_select %p174, %s20, 1
          %p176 = scmp.lt.s32.totalorder %s173, 31
          %s177 = scalar_select %p176, %s173, 31
          %s178 = smul.addr %s175, 32
          %s179 = sadd.s32 %s177, %s178
          %s180 = smul.addr %s179, 4
          %s181 = scalar_lea.vmem %s0, %s180
          %s182 = smul.u32 32, %s21
        $region32: #{tpu_custom_call.1} parent=27 // pred_fallthru
          _
      $region28: #{tpu_custom_call.1} parent=5 // pred_fallthru
        _
      %p183 = scmp.le.s32.totalorder 1, %s13
      %p184 = scmp.lt.s32.totalorder %s13, 3
      %p185 = pnand %p183, %p184
      %p186 = pneg %p185
      // Predicated region
      $region33: #{tpu_custom_call.1} parent=5 // pred_check
        _
      $region34: #{tpu_custom_call.1} parent=5 // pred_check_branch
        %188 = sbr.rel (%p185) target = $region36
      $region35: #{tpu_custom_call.1} parent=5 // pred_region
        %s189 = ssub.s32 %s13, 1
        %s190 = smul.u32 32, %s23
        %p191 = scmp.lt.s32.totalorder %s22, 1
        %s192 = scalar_select %p191, %s22, 1
        %p193 = scmp.lt.s32.totalorder %s190, 31
        %s194 = scalar_select %p193, %s190, 31
        %s195 = smul.addr %s192, 32
        %s196 = sadd.s32 %s194, %s195
        %s197 = smul.addr %s196, 4
        %s198 = scalar_lea.vmem %s0, %s197
        %p199 = pneg %p53
        %p200 = pneg %p50
        %p201 = pneg %p74
        %p202 = pneg %p71
        %p203 = pneg %p95
        %p204 = pneg %p92
        %p205 = pneg %p116
        %p206 = pneg %p113
        %p207 = pneg %p142
        %p208 = pneg %p139
        %s209 = sand.u32 %s129, 1
        %s210 = scalar_lea.sflag [#allocation4], %s209
        %s211 = sand.u32 %s129, 1
        %s212 = scalar_lea.vmem [#allocation3], %s211
        %s213 = smul.u32 32, %s23
        %p214 = scmp.lt.s32.totalorder %s22, 1
        %s215 = scalar_select %p214, %s22, 1
        %p216 = scmp.lt.s32.totalorder %s213, 31
        %s217 = scalar_select %p216, %s213, 31
        %s218 = smul.addr %s215, 32
        %s219 = sadd.s32 %s217, %s218
        %s220 = smul.addr %s219, 4
        %s221 = scalar_lea.vmem %s0, %s220
        %s222 = smul.u32 32, %s23
        %p224 = scmp.eq.s32.totalorder %s23, 0
        // Predicated region
        $region37: #{tpu_custom_call.1} parent=35 // pred_check
          %p225 = pneg %p224
        $region38: #{tpu_custom_call.1} parent=35 // pred_check_branch
          %227 = sbr.rel (%p225) target = $region40
        $region39: #{tpu_custom_call.1} parent=35 // pred_region
          %228 = vst [vmem:[#allocation2] sm:$0xff] 0.0
        $region40: #{tpu_custom_call.1} parent=35 // pred_fallthru
          _
        %v229 = vld [vmem:[%s221] sm:$0xf]
        %v230 = vld [vmem:[%s221 + $0x4] sm:$0xf]
        %v231 = vld [vmem:[%s221 + $0x8] sm:$0xf]
        %v232 = vld [vmem:[%s221 + $0xc] sm:$0xf]
        %v233 = vld [vmem:[%s221 + $0x10] sm:$0xf]
        %v234 = vld [vmem:[%s221 + $0x14] sm:$0xf]
        %v235 = vld [vmem:[%s221 + $0x18] sm:$0xf]
        %v236 = vld [vmem:[%s221 + $0x1c] sm:$0xf]
        %v237 = vld [vmem:[%s221 + $0x20] sm:$0xf]
        %v238 = vld [vmem:[%s221 + $0x24] sm:$0xf]
        %v239 = vld [vmem:[%s221 + $0x28] sm:$0xf]
        %v240 = vld [vmem:[%s221 + $0x2c] sm:$0xf]
        %v241 = vld [vmem:[%s221 + $0x30] sm:$0xf]
        %v242 = vld [vmem:[%s221 + $0x34] sm:$0xf]
        %v243 = vld [vmem:[%s221 + $0x38] sm:$0xf]
        %v244 = vld [vmem:[%s221 + $0x3c] sm:$0xf]
        %v245 = vld [vmem:[%s221 + $0x40] sm:$0xf]
        %v246 = vld [vmem:[%s221 + $0x44] sm:$0xf]
        %v247 = vld [vmem:[%s221 + $0x48] sm:$0xf]
        %v248 = vld [vmem:[%s221 + $0x4c] sm:$0xf]
        %v249 = vld [vmem:[%s221 + $0x50] sm:$0xf]
        %v250 = vld [vmem:[%s221 + $0x54] sm:$0xf]
        %v251 = vld [vmem:[%s221 + $0x58] sm:$0xf]
        %v252 = vld [vmem:[%s221 + $0x5c] sm:$0xf]
        %v253 = vld [vmem:[%s221 + $0x60] sm:$0xf]
        %v254 = vld [vmem:[%s221 + $0x64] sm:$0xf]
        %v255 = vld [vmem:[%s221 + $0x68] sm:$0xf]
        %v256 = vld [vmem:[%s221 + $0x6c] sm:$0xf]
        %v257 = vld [vmem:[%s221 + $0x70] sm:$0xf]
        %v258 = vld [vmem:[%s221 + $0x74] sm:$0xf]
        %v259 = vld [vmem:[%s221 + $0x78] sm:$0xf]
        %v260 = vld [vmem:[%s221 + $0x7c] sm:$0xf]
        %v261 = vld [vmem:[%s1] sm:$0xf]
        %v262 = vld [vmem:[%s1 + $0x4] sm:$0xf]
        %v263 = vld [vmem:[%s1 + $0x8] sm:$0xf]
        %v264 = vld [vmem:[%s1 + $0xc] sm:$0xf]
        %v265 = vld [vmem:[%s1 + $0x10] sm:$0x7]
        %v298 = vunpack.c.l.b16 %v229
        %v299 = vunpack.c.l.b16 %v230
        %v300 = vunpack.c.l.b16 %v231
        %v301 = vunpack.c.l.b16 %v232
        %v302 = vunpack.c.l.b16 %v233
        %v303 = vunpack.c.l.b16 %v234
        %v304 = vunpack.c.l.b16 %v235
        %v305 = vunpack.c.l.b16 %v236
        %v306 = vunpack.c.l.b16 %v237
        %v307 = vunpack.c.l.b16 %v238
        %v308 = vunpack.c.l.b16 %v239
        %v309 = vunpack.c.l.b16 %v240
        %v310 = vunpack.c.l.b16 %v241
        %v311 = vunpack.c.l.b16 %v242
        %v312 = vunpack.c.l.b16 %v243
        %v313 = vunpack.c.l.b16 %v244
        %v314 = vunpack.c.l.b16 %v245
        %v315 = vunpack.c.l.b16 %v246
        %v316 = vunpack.c.l.b16 %v247
        %v317 = vunpack.c.l.b16 %v248
        %v318 = vunpack.c.l.b16 %v249
        %v319 = vunpack.c.l.b16 %v250
        %v320 = vunpack.c.l.b16 %v251
        %v321 = vunpack.c.l.b16 %v252
        %v322 = vunpack.c.l.b16 %v253
        %v323 = vunpack.c.l.b16 %v254
        %v324 = vunpack.c.l.b16 %v255
        %v325 = vunpack.c.l.b16 %v256
        %v326 = vunpack.c.l.b16 %v257
        %v327 = vunpack.c.l.b16 %v258
        %v328 = vunpack.c.l.b16 %v259
        %v329 = vunpack.c.l.b16 %v260
        %v330 = vpack.c.b16 %v299, %v298
        %v331 = vpack.c.b16 %v301, %v300
        %v332 = vpack.c.b16 %v303, %v302
        %v333 = vpack.c.b16 %v305, %v304
        %v334 = vpack.c.b16 %v307, %v306
        %v335 = vpack.c.b16 %v309, %v308
        %v336 = vpack.c.b16 %v311, %v310
        %v337 = vpack.c.b16 %v313, %v312
        %v338 = vpack.c.b16 %v315, %v314
        %v339 = vpack.c.b16 %v317, %v316
        %v340 = vpack.c.b16 %v319, %v318
        %v341 = vpack.c.b16 %v321, %v320
        %v342 = vpack.c.b16 %v323, %v322
        %v343 = vpack.c.b16 %v325, %v324
        %v344 = vpack.c.b16 %v327, %v326
        %v345 = vpack.c.b16 %v329, %v328
        %v351 = vunpack.c.l.b16 %v261
        %v352 = vunpack.c.l.b16 %v262
        %v353 = vunpack.c.l.b16 %v263
        %v354 = vunpack.c.l.b16 %v264
        %v355 = vunpack.c.l.b16 %v265
        %v356 = vpack.c.b16 %v352, %v351
        %v357 = vpack.c.b16 %v354, %v353
        %v358 = vpack.c.b16 %v355, %v355
        %vm361 = vcmask 302080
        %v363 = vsel %vm361, %v330, 0
        %v366 = vsel %vm361, %v331, 0
        %v369 = vsel %vm361, %v332, 0
        %v372 = vsel %vm361, %v333, 0
        %v375 = vsel %vm361, %v334, 0
        %v378 = vsel %vm361, %v335, 0
        %v381 = vsel %vm361, %v336, 0
        %v384 = vsel %vm361, %v337, 0
        %v387 = vsel %vm361, %v338, 0
        %v390 = vsel %vm361, %v339, 0
        %v393 = vsel %vm361, %v340, 0
        %v396 = vsel %vm361, %v341, 0
        %v399 = vsel %vm361, %v342, 0
        %v402 = vsel %vm361, %v343, 0
        %v405 = vsel %vm361, %v344, 0
        %v408 = vsel %vm361, %v345, 0
        %vm410 = vcmask 1041408
        %vm411 = vcmask 1042432
        %v412 = vsel %vm410, 4294967295, 65535
        %v413 = vsel %vm411, %v412, 0
        %v415 = vand.u32 %v358, %v413
        %417 = vmatprep.subr.bf16.mxu0 0
        %418 = vmatpush1.bf16.msra.mxu0 %v356
        %419 = vmatprep.subr.bf16.mxu0 0
        %420 = vmatpush1.bf16.msra.mxu0 %v357
        %421 = vmatprep.subr.bf16.mxu0 0
        %422 = vmatpush1.bf16.msra.mxu0 %v415
        %423 = vmatprep.subr.bf16.mxu0 0
        %424 = vmatpush1.bf16.msra.mxu0 0
        %425 = vmatprep.subr.bf16.mxu0 0
        %426 = vmatpush1.bf16.msra.mxu0 0
        %427 = vmatprep.subr.bf16.mxu0 0
        %428 = vmatpush1.bf16.msra.mxu0 0
        %429 = vmatprep.subr.bf16.mxu0 0
        %430 = vmatpush1.bf16.msra.mxu0 0
        %431 = vmatprep.subr.bf16.mxu0 0
        %432 = vmatpush1.bf16.msra.mxu0 0
        %433 = vmatprep.subr.bf16.mxu0 0
        %434 = vmatpush1.bf16.msra.mxu0 0
        %435 = vmatprep.subr.bf16.mxu0 0
        %436 = vmatpush1.bf16.msra.mxu0 0
        %437 = vmatprep.subr.bf16.mxu0 0
        %438 = vmatpush1.bf16.msra.mxu0 0
        %439 = vmatprep.subr.bf16.mxu0 0
        %440 = vmatpush1.bf16.msra.mxu0 0
        %441 = vmatprep.subr.bf16.mxu0 0
        %442 = vmatpush1.bf16.msra.mxu0 0
        %443 = vmatprep.subr.bf16.mxu0 0
        %444 = vmatpush1.bf16.msra.mxu0 0
        %445 = vmatprep.subr.bf16.mxu0 0
        %446 = vmatpush1.bf16.msra.mxu0 0
        %447 = vmatprep.subr.bf16.mxu0 0
        %448 = vmatpush1.bf16.msra.mxu0 0
        %449 = vmatprep.mubr.bf16.mxu0 0
        %450 = vmatmul.mubr.bf16.gmra.mrb[0].mxu0 %v363
        %v451 = vpop.f32.mrb[0].mxu0
        %v452 = vadd.f32 0.0, %v451
        %v453 = vpop.f32.mrb[0].mxu0
        %v454 = vpop.f32.mrb[0].mxu0
        %v455 = vadd.f32 0.0, %v454
        %v456 = vpop.f32.mrb[0].mxu0
        %457 = vmatprep.mubr.bf16.mxu0 0
        %458 = vmatmul.mubr.bf16.gmra.mrb[0].mxu0 %v366
        %v459 = vpop.f32.mrb[0].mxu0
        %v460 = vadd.f32 0.0, %v459
        %v461 = vpop.f32.mrb[0].mxu0
        %v462 = vpop.f32.mrb[0].mxu0
        %v463 = vadd.f32 0.0, %v462
        %v464 = vpop.f32.mrb[0].mxu0
        %465 = vmatprep.mubr.bf16.mxu0 0
        %466 = vmatmul.mubr.bf16.gmra.mrb[0].mxu0 %v369
        %v467 = vpop.f32.mrb[0].mxu0
        %v468 = vadd.f32 0.0, %v467
        %v469 = vpop.f32.mrb[0].mxu0
        %v470 = vpop.f32.mrb[0].mxu0
        %v471 = vadd.f32 0.0, %v470
        %v472 = vpop.f32.mrb[0].mxu0
        %473 = vmatprep.mubr.bf16.mxu0 0
        %474 = vmatmul.mubr.bf16.gmra.mrb[0].mxu0 %v372
        %v475 = vpop.f32.mrb[0].mxu0
        %v476 = vadd.f32 0.0, %v475
        %v477 = vpop.f32.mrb[0].mxu0
        %v478 = vpop.f32.mrb[0].mxu0
        %v479 = vadd.f32 0.0, %v478
        %v480 = vpop.f32.mrb[0].mxu0
        %481 = vmatprep.mubr.bf16.mxu0 0
        %482 = vmatmul.mubr.bf16.gmra.mrb[0].mxu0 %v375
        %v483 = vpop.f32.mrb[0].mxu0
        %v484 = vadd.f32 0.0, %v483
        %v485 = vpop.f32.mrb[0].mxu0
        %v486 = vpop.f32.mrb[0].mxu0
        %v487 = vadd.f32 0.0, %v486
        %v488 = vpop.f32.mrb[0].mxu0
        %489 = vmatprep.mubr.bf16.mxu0 0
        %490 = vmatmul.mubr.bf16.gmra.mrb[0].mxu0 %v378
        %v491 = vpop.f32.mrb[0].mxu0
        %v492 = vadd.f32 0.0, %v491
        %v493 = vpop.f32.mrb[0].mxu0
        %v494 = vpop.f32.mrb[0].mxu0
        %v495 = vadd.f32 0.0, %v494
        %v496 = vpop.f32.mrb[0].mxu0
        %497 = vmatprep.mubr.bf16.mxu0 0
        %498 = vmatmul.mubr.bf16.gmra.mrb[0].mxu0 %v381
        %v499 = vpop.f32.mrb[0].mxu0
        %v500 = vadd.f32 0.0, %v499
        %v501 = vpop.f32.mrb[0].mxu0
        %v502 = vpop.f32.mrb[0].mxu0
        %v503 = vadd.f32 0.0, %v502
        %v504 = vpop.f32.mrb[0].mxu0
        %505 = vmatprep.mubr.bf16.mxu0 0
        %506 = vmatmul.mubr.bf16.gmra.mrb[0].mxu0 %v384
        %v507 = vpop.f32.mrb[0].mxu0
        %v508 = vadd.f32 0.0, %v507
        %v509 = vpop.f32.mrb[0].mxu0
        %v510 = vpop.f32.mrb[0].mxu0
        %v511 = vadd.f32 0.0, %v510
        %v512 = vpop.f32.mrb[0].mxu0
        %513 = vmatprep.mubr.bf16.mxu0 0
        %514 = vmatmul.mubr.bf16.gmra.mrb[0].mxu0 %v387
        %v515 = vpop.f32.mrb[0].mxu0
        %v516 = vadd.f32 0.0, %v515
        %v517 = vpop.f32.mrb[0].mxu0
        %v518 = vpop.f32.mrb[0].mxu0
        %v519 = vadd.f32 0.0, %v518
        %v520 = vpop.f32.mrb[0].mxu0
        %521 = vmatprep.mubr.bf16.mxu0 0
        %522 = vmatmul.mubr.bf16.gmra.mrb[0].mxu0 %v390
        %v523 = vpop.f32.mrb[0].mxu0
        %v524 = vadd.f32 0.0, %v523
        %v525 = vpop.f32.mrb[0].mxu0
        %v526 = vpop.f32.mrb[0].mxu0
        %v527 = vadd.f32 0.0, %v526
        %v528 = vpop.f32.mrb[0].mxu0
        %529 = vmatprep.mubr.bf16.mxu0 0
        %530 = vmatmul.mubr.bf16.gmra.mrb[0].mxu0 %v393
        %v531 = vpop.f32.mrb[0].mxu0
        %v532 = vadd.f32 0.0, %v531
        %v533 = vpop.f32.mrb[0].mxu0
        %v534 = vpop.f32.mrb[0].mxu0
        %v535 = vadd.f32 0.0, %v534
        %v536 = vpop.f32.mrb[0].mxu0
        %537 = vmatprep.mubr.bf16.mxu0 0
        %538 = vmatmul.mubr.bf16.gmra.mrb[0].mxu0 %v396
        %v539 = vpop.f32.mrb[0].mxu0
        %v540 = vadd.f32 0.0, %v539
        %v541 = vpop.f32.mrb[0].mxu0
        %v542 = vpop.f32.mrb[0].mxu0
        %v543 = vadd.f32 0.0, %v542
        %v544 = vpop.f32.mrb[0].mxu0
        %545 = vmatprep.mubr.bf16.mxu0 0
        %546 = vmatmul.mubr.bf16.gmra.mrb[0].mxu0 %v399
        %v547 = vpop.f32.mrb[0].mxu0
        %v548 = vadd.f32 0.0, %v547
        %v549 = vpop.f32.mrb[0].mxu0
        %v550 = vpop.f32.mrb[0].mxu0
        %v551 = vadd.f32 0.0, %v550
        %v552 = vpop.f32.mrb[0].mxu0
        %553 = vmatprep.mubr.bf16.mxu0 0
        %554 = vmatmul.mubr.bf16.gmra.mrb[0].mxu0 %v402
        %v555 = vpop.f32.mrb[0].mxu0
        %v556 = vadd.f32 0.0, %v555
        %v557 = vpop.f32.mrb[0].mxu0
        %v558 = vpop.f32.mrb[0].mxu0
        %v559 = vadd.f32 0.0, %v558
        %v560 = vpop.f32.mrb[0].mxu0
        %561 = vmatprep.mubr.bf16.mxu0 0
        %562 = vmatmul.mubr.bf16.gmra.mrb[0].mxu0 %v405
        %v563 = vpop.f32.mrb[0].mxu0
        %v564 = vadd.f32 0.0, %v563
        %v565 = vpop.f32.mrb[0].mxu0
        %v566 = vpop.f32.mrb[0].mxu0
        %v567 = vadd.f32 0.0, %v566
        %v568 = vpop.f32.mrb[0].mxu0
        %569 = vmatprep.mubr.bf16.mxu0 0
        %570 = vmatmul.mubr.bf16.gmra.mrb[0].mxu0 %v408
        %v571 = vpop.f32.mrb[0].mxu0
        %v572 = vadd.f32 0.0, %v571
        %v573 = vpop.f32.mrb[0].mxu0
        %v574 = vpop.f32.mrb[0].mxu0
        %v575 = vadd.f32 0.0, %v574
        %v576 = vpop.f32.mrb[0].mxu0
        %577 = vdwg.mxu0
        %v578 = vmax.f32 %v452, 0.0
        %v579 = vmax.f32 %v455, 0.0
        %v580 = vmax.f32 %v460, 0.0
        %v581 = vmax.f32 %v463, 0.0
        %v582 = vmax.f32 %v468, 0.0
        %v583 = vmax.f32 %v471, 0.0
        %v584 = vmax.f32 %v476, 0.0
        %v585 = vmax.f32 %v479, 0.0
        %v586 = vmax.f32 %v484, 0.0
        %v587 = vmax.f32 %v487, 0.0
        %v588 = vmax.f32 %v492, 0.0
        %v589 = vmax.f32 %v495, 0.0
        %v590 = vmax.f32 %v500, 0.0
        %v591 = vmax.f32 %v503, 0.0
        %v592 = vmax.f32 %v508, 0.0
        %v593 = vmax.f32 %v511, 0.0
        %v594 = vmax.f32 %v516, 0.0
        %v595 = vmax.f32 %v519, 0.0
        %v596 = vmax.f32 %v524, 0.0
        %v597 = vmax.f32 %v527, 0.0
        %v598 = vmax.f32 %v532, 0.0
        %v599 = vmax.f32 %v535, 0.0
        %v600 = vmax.f32 %v540, 0.0
        %v601 = vmax.f32 %v543, 0.0
        %v602 = vmax.f32 %v548, 0.0
        %v603 = vmax.f32 %v551, 0.0
        %v604 = vmax.f32 %v556, 0.0
        %v605 = vmax.f32 %v559, 0.0
        %v606 = vmax.f32 %v564, 0.0
        %v607 = vmax.f32 %v567, 0.0
        %v608 = vmax.f32 %v572, 0.0
        %v609 = vmax.f32 %v575, 0.0
        %v610 = vld [vmem:[#allocation2] sm:$0xff]
        %v611 = vadd.f32 %v578, %v579
        %v612 = vadd.f32 %v611, %v580
        %v613 = vadd.f32 %v612, %v581
        %v614 = vadd.f32 %v613, %v582
        %v615 = vadd.f32 %v614, %v583
        %v616 = vadd.f32 %v615, %v584
        %v617 = vadd.f32 %v616, %v585
        %v618 = vadd.f32 %v617, %v586
        %v619 = vadd.f32 %v618, %v587
        %v620 = vadd.f32 %v619, %v588
        %v621 = vadd.f32 %v620, %v589
        %v622 = vadd.f32 %v621, %v590
        %v623 = vadd.f32 %v622, %v591
        %v624 = vadd.f32 %v623, %v592
        %v625 = vadd.f32 %v624, %v593
        %v626 = vadd.f32 %v625, %v594
        %v627 = vadd.f32 %v626, %v595
        %v628 = vadd.f32 %v627, %v596
        %v629 = vadd.f32 %v628, %v597
        %v630 = vadd.f32 %v629, %v598
        %v631 = vadd.f32 %v630, %v599
        %v632 = vadd.f32 %v631, %v600
        %v633 = vadd.f32 %v632, %v601
        %v634 = vadd.f32 %v633, %v602
        %v635 = vadd.f32 %v634, %v603
        %v636 = vadd.f32 %v635, %v604
        %v637 = vadd.f32 %v636, %v605
        %v638 = vadd.f32 %v637, %v606
        %v639 = vadd.f32 %v638, %v607
        %v640 = vadd.f32 %v639, %v608
        %v641 = vadd.f32 %v640, %v609
        %v642 = vadd.f32 %v610, %v641
        %643 = vst [vmem:[#allocation2] sm:$0xff] %v642
        // Predicated region
        $region41: #{tpu_custom_call.1} parent=35 // pred_check
          %p644 = pneg %p224
        $region42: #{tpu_custom_call.1} parent=35 // pred_check_branch
          %646 = sbr.rel (%p644) target = $region44
        $region43: #{tpu_custom_call.1} parent=35 // pred_region
          %v647 = vld [vmem:[#allocation2] sm:$0xff]
          %v648 = vrot.slane %v647, 4
          %v649 = vadd.f32 %v647, %v648
          %v650 = vrot.slane %v649, 2
          %v651 = vadd.f32 %v649, %v650
          %v652 = vrot.slane %v651, 1
          %v653 = vadd.f32 %v651, %v652
          %v654 = vmul.f32 %v653, 0.00390625
          %v655 = vld [vmem:[%s2] sm:$0xff]
          %v656 = vld [vmem:[%s2 + $0x8] sm:$0xff]
          %v657 = vld [vmem:[%s2 + $0x10] sm:$0xff]
          %v658 = vld [vmem:[%s2 + $0x18] sm:$0xff]
          %v659 = vld [vmem:[%s2 + $0x20] sm:$0xff]
          %v660 = vld [vmem:[%s2 + $0x28] sm:$0xff]
          %v661 = vld [vmem:[%s2 + $0x30] sm:$0xff]
          %v662 = vld [vmem:[%s2 + $0x38] sm:$0xff]
          %v663 = vld [vmem:[%s2 + $0x40] sm:$0xff]
          %v664 = vld [vmem:[%s2 + $0x48] sm:$0xff]
          %v665 = vld [vmem:[%s2 + $0x50] sm:$0xff]
          %v666 = vld [vmem:[%s2 + $0x58] sm:$0xff]
          %v667 = vld [vmem:[%s2 + $0x60] sm:$0xff]
          %v668 = vld [vmem:[%s2 + $0x68] sm:$0xff]
          %v669 = vld [vmem:[%s2 + $0x70] sm:$0xff]
          %v670 = vld [vmem:[%s2 + $0x78] sm:$0xff]
          %v671 = vld [vmem:[%s3] sm:$0x1]
          %672 = vmatprep.subr.mxu0 0.0
          %673 = vmatpush1.msra.mxu0 %v655
          %674 = vmatprep.subr.mxu0 0.0
          %675 = vmatpush1.msra.mxu0 %v656
          %676 = vmatprep.subr.mxu0 0.0
          %677 = vmatpush1.msra.mxu0 %v657
          %678 = vmatprep.subr.mxu0 0.0
          %679 = vmatpush1.msra.mxu0 %v658
          %680 = vmatprep.subr.mxu0 0.0
          %681 = vmatpush1.msra.mxu0 %v659
          %682 = vmatprep.subr.mxu0 0.0
          %683 = vmatpush1.msra.mxu0 %v660
          %684 = vmatprep.subr.mxu0 0.0
          %685 = vmatpush1.msra.mxu0 %v661
          %686 = vmatprep.subr.mxu0 0.0
          %687 = vmatpush1.msra.mxu0 %v662
          %688 = vmatprep.subr.mxu0 0.0
          %689 = vmatpush1.msra.mxu0 %v663
          %690 = vmatprep.subr.mxu0 0.0
          %691 = vmatpush1.msra.mxu0 %v664
          %692 = vmatprep.subr.mxu0 0.0
          %693 = vmatpush1.msra.mxu0 %v665
          %694 = vmatprep.subr.mxu0 0.0
          %695 = vmatpush1.msra.mxu0 %v666
          %696 = vmatprep.subr.mxu0 0.0
          %697 = vmatpush1.msra.mxu0 %v667
          %698 = vmatprep.subr.mxu0 0.0
          %699 = vmatpush1.msra.mxu0 %v668
          %700 = vmatprep.subr.mxu0 0.0
          %701 = vmatpush1.msra.mxu0 %v669
          %702 = vmatprep.subr.mxu0 0.0
          %703 = vmatpush1.msra.mxu0 %v670
          %704 = vmatprep.subr.mxu0 0.0
          %705 = vmatpush1.msra.mxu0 0.0
          %706 = vmatprep.subr.mxu0 0.0
          %707 = vmatpush1.msra.mxu0 0.0
          %708 = vmatprep.subr.mxu0 0.0
          %709 = vmatpush1.msra.mxu0 0.0
          %710 = vmatprep.subr.mxu0 0.0
          %711 = vmatpush1.msra.mxu0 0.0
          %712 = vmatprep.subr.mxu0 0.0
          %713 = vmatpush1.msra.mxu0 0.0
          %714 = vmatprep.subr.mxu0 0.0
          %715 = vmatpush1.msra.mxu0 0.0
          %716 = vmatprep.subr.mxu0 0.0
          %717 = vmatpush1.msra.mxu0 0.0
          %718 = vmatprep.subr.mxu0 0.0
          %719 = vmatpush1.msra.mxu0 0.0
          %720 = vmatprep.subr.mxu0 0.0
          %721 = vmatpush1.msra.mxu0 0.0
          %722 = vmatprep.subr.mxu0 0.0
          %723 = vmatpush1.msra.mxu0 0.0
          %724 = vmatprep.subr.mxu0 0.0
          %725 = vmatpush1.msra.mxu0 0.0
          %726 = vmatprep.subr.mxu0 0.0
          %727 = vmatpush1.msra.mxu0 0.0
          %728 = vmatprep.subr.mxu0 0.0
          %729 = vmatpush1.msra.mxu0 0.0
          %730 = vmatprep.subr.mxu0 0.0
          %731 = vmatpush1.msra.mxu0 0.0
          %732 = vmatprep.subr.mxu0 0.0
          %733 = vmatpush1.msra.mxu0 0.0
          %734 = vmatprep.subr.mxu0 0.0
          %735 = vmatpush1.msra.mxu0 0.0
          %736 = vmatprep.mubr.f32.mxu0 0.0
          %737 = vmatmul.mubr.f32.gmra.mrb[0].mxu0 %v654
          %v738 = vpop.f32.mrb[0].mxu0
          %v739 = vadd.f32 %v671, %v738
          %v740 = vpop.f32.mrb[0].mxu0
          %741 = vdwg.mxu0
          %742 = vst [vmem:[%s212] sm:$0x1] %v739
        $region44: #{tpu_custom_call.1} parent=35 // pred_fallthru
          _
        %s743 = sand.u32 %s129, 1
        %s744 = scalar_lea.sflag [#allocation4], %s743
        %s745 = sand.u32 %s129, 1
        %s746 = scalar_lea.vmem [#allocation3], %s745
        // Predicated region
        $region45: #{tpu_custom_call.1} parent=35 // pred_check
          %p747 = pneg %p139
        $region46: #{tpu_custom_call.1} parent=35 // pred_check_branch
          %749 = sbr.rel (%p747) target = $region48
        $region47: #{tpu_custom_call.1} parent=35 // pred_region
          %s751 = ssub.s32 16, 16
          %752 = vsyncadd %s744, %s751
          %s753 = smul.addr %s22, 16
          %s754 = scalar_lea.hbm %s4, %s753
          %s756 = sshll.u32 %s746, 4
          %s757 = int_to_ptr.vmem [resolvable:$true] %s756
          %759 = dma.vmem_to_hbm [thread:$0]  %s757, 16, %s754, %s744
        $region48: #{tpu_custom_call.1} parent=35 // pred_fallthru
          _
      $region36: #{tpu_custom_call.1} parent=5 // pred_fallthru
        _
      %p760 = scmp.le.s32.totalorder 2, %s13
      // Predicated region
      $region49: #{tpu_custom_call.1} parent=5 // pred_check
        %p761 = pneg %p760
      $region50: #{tpu_custom_call.1} parent=5 // pred_check_branch
        %763 = sbr.rel (%p761) target = $region52
      $region51: #{tpu_custom_call.1} parent=5 // pred_region
        %s764 = ssub.s32 %s13, 2
        // Predicated region
        $region53: #{tpu_custom_call.1} parent=51 // pred_check
          %p765 = pneg %p145
        $region54: #{tpu_custom_call.1} parent=51 // pred_check_branch
          %767 = sbr.rel (%p765) target = $region56
        $region55: #{tpu_custom_call.1} parent=51 // pred_region
          %s768 = sand.u32 %s130, 1
          %s769 = scalar_lea.sflag [#allocation4], %s768
          %s770 = sand.u32 %s130, 1
          %s771 = scalar_lea.vmem [#allocation3], %s770
          %772 = dma.done %s769, 16
        $region56: #{tpu_custom_call.1} parent=51 // pred_fallthru
          _
      $region52: #{tpu_custom_call.1} parent=5 // pred_fallthru
        _
    $region6: #{tpu_custom_call.1} parent=1 // loop_footer
      %s17 = sadd.s32 1, %s13
    $region7: #{tpu_custom_call.1} parent=1 // loop_footer_branch
      %12 = sbr.rel target = $region3
    $region8: #{tpu_custom_call.1} parent=1 // loop_exit
      _
    %773 = vsyncpa [#allocation4], 1
    %s774 = scalar_lea.sflag [#allocation4], 1
    %775 = vsyncpa %s774, 1

</llo_original>
